<compile_context>
chip_gen: v7x
topology: tpu7x:2x2x1
jax: 0.10.0
libtpu: 0.0.40
codegen_flags: <defaults>
</compile_context>

<pallas_src>
import functools
import math

import jax
import jax.numpy as jnp
from jax.experimental import pallas as pl
from jax.experimental.pallas import tpu as pltpu


# ---------------------------------------------------------------------------
# Sizing helpers
# ---------------------------------------------------------------------------
def _round_up(x, m):
    return (x + m - 1) // m * m


def _pad_channels(c):
    # Don't inflate small channel counts: 128-multiples only when the real count
    # is already >= 128, otherwise sublane (8) granularity.
    return _round_up(c, 128) if c >= 128 else _round_up(c, 8)


def _pick_cin_pp(cin, nsample):
    # Lane-pack the K neighbors: per-neighbor channel padding chosen so that
    # K * cin_pp is a multiple of 128 (lane-dense input block, dense HBM->VMEM DMA).
    g = 128 // math.gcd(nsample, 128)
    cpp = _round_up(cin, g)
    if cpp > max(32, 2 * _round_up(cin, 8)):
        # Pathological K (e.g. odd): accept a partially filled last lane tile
        # instead of massive per-neighbor channel padding.
        cpp = _round_up(cin, 8)
    return cpp


def _vmem_capacity_bytes():
    try:
        return int(pltpu.get_tpu_info().vmem_capacity_bytes)
    except Exception:
        return 64 << 20  # conservative (v7x-sized) fallback


def _pick_tm(M, nsample, cin_pp, c1p, c2p):
    """Pick the M-tile so the full working set fits VMEM with headroom (generation-
    aware) and the grid keeps >= 2 steps for 2-TensorCore chips."""
    vmem_cap = _vmem_capacity_bytes()
    # ~48 MiB working set on v7x (64 MiB/TC); up to 96 MiB on v5e/v6e (128 MiB).
    vmem_limit = min(int(vmem_cap * 0.75), 96 << 20)
    budget = int(vmem_limit * 0.85)  # headroom for compiler scratch

    # TM-independent VMEM: (double-buffered) weights + biases, plus slack.
    fixed = 2 * (cin_pp * c1p * 2 + c1p * c2p * 2 + c1p * 4 + c2p * 4) + (1 << 20)

    # Per-output-row bytes:
    #   double-buffered bf16 input rows        : 2 * (K*cin_pp) * 2
    #   double-buffered f32 output rows        : 2 * c2p * 4
    #   live per-k intermediates               : h1 f32 + h1 bf16 copy + h2 f32 + running max
    per_row = (2 * nsample * cin_pp * 2) + (2 * c2p * 4) \
              + (c1p * 4 + c1p * 2 + c2p * 4 + c2p * 4)

    tm = (budget - fixed) // per_row
    tm = max(8, min(1024, (tm // 8) * 8))

    # Keep >= 2 (prefer 4) grid steps so v7x's two TensorCores both get M-rows.
    m8 = _round_up(M, 8)
    if m8 >= 32:
        tm = min(tm, max(8, _round_up(pl.cdiv(m8, 4), 8)))
    elif m8 >= 16:
        tm = min(tm, max(8, _round_up(pl.cdiv(m8, 2), 8)))
    tm = min(tm, m8)
    return tm, vmem_limit


# ---------------------------------------------------------------------------
# Pallas kernel: fused MLP (2x [1x1 conv + folded BN + ReLU]) + max over K
# ---------------------------------------------------------------------------
def _td_mlp_kernel(x_ref, w1_ref, b1_ref, w2_ref, b2_ref, o_ref, *, nsample, cin_pp):
    """x_ref : [TM, K*cin_pp] bf16 (neighbor k occupies lanes [k*cin_pp, (k+1)*cin_pp))
       w1    : [cin_pp, c1p] bf16,  b1: [1, c1p] f32   (BN scale folded into W)
       w2    : [c1p,   c2p] bf16,  b2: [1, c2p] f32
       o_ref : [TM, c2p] f32
    """
    w1 = w1_ref[...]
    b1 = b1_ref[...]
    w2 = w2_ref[...]
    b2 = b2_ref[...]
    acc = None
    # Small unrolled k-loop: per-k intermediates are only [TM, C] and the max over
    # neighbors is a running elementwise maximum (VPU), not a cross-sublane reduce.
    for k in range(nsample):
        xk = x_ref[:, k * cin_pp:(k + 1) * cin_pp]                   # [TM, cin_pp]
        h = jnp.dot(xk, w1, preferred_element_type=jnp.float32)
        h = jnp.maximum(h + b1, 0.0)                                  # conv1 + BN1 + ReLU
        h = jnp.dot(h.astype(jnp.bfloat16), w2,
                    preferred_element_type=jnp.float32)
        h = jnp.maximum(h + b2, 0.0)                                  # conv2 + BN2 + ReLU
        acc = h if acc is None else jnp.maximum(acc, h)               # max-pool over K
    o_ref[...] = acc


def td_mlp_maxpool(x_packed, w1, b1, w2, b2, c_out, nsample, cin_pp):
    """x_packed: [M, K*cin_pp] bf16 -> [M, c_out] f32 (max over K of the 2-layer MLP)."""
    M, KC = x_packed.shape
    c1p, c2p = w1.shape[1], w2.shape[1]
    TM, vmem_limit = _pick_tm(M, nsample, cin_pp, c1p, c2p)
    Mp = _round_up(M, TM)
    if Mp != M:
        # Padded rows produce relu(bias) junk; sliced off below (wasted but correct).
        x_packed = jnp.pad(x_packed, ((0, Mp - M), (0, 0)))

    kernel = functools.partial(_td_mlp_kernel, nsample=nsample, cin_pp=cin_pp)
    out = pl.pallas_call(
        kernel,
        out_shape=jax.ShapeDtypeStruct((Mp, c2p), jnp.float32),
        grid_spec=pltpu.PrefetchScalarGridSpec(
            num_scalar_prefetch=0,
            grid=(Mp // TM,),
            in_specs=[
                pl.BlockSpec((TM, KC), lambda i: (i, 0)),
                # Constant-index weights/biases: small here; for large c1p/c2p they
                # could be single-buffered (pipeline_mode=pl.Buffered(1)) — instead we
                # charge the default 2x buffering in _pick_tm's VMEM model.
                pl.BlockSpec((cin_pp, c1p), lambda i: (0, 0)),
                pl.BlockSpec((1, c1p), lambda i: (0, 0)),
                pl.BlockSpec((c1p, c2p), lambda i: (0, 0)),
                pl.BlockSpec((1, c2p), lambda i: (0, 0)),
            ],
            out_specs=pl.BlockSpec((TM, c2p), lambda i: (i, 0)),
        ),
        compiler_params=pltpu.CompilerParams(
            dimension_semantics=("parallel",),          # M axis shardable across TCs
            vmem_limit_bytes=int(vmem_limit)),
    )(x_packed, w1, b1, w2, b2)

    out = out[:M]
    if c2p != c_out:
        out = out[:, :c_out]
    return out


# ---------------------------------------------------------------------------
# Plain-JAX glue reproducing the PyTorch point ops (data-dependent, sequential)
# ---------------------------------------------------------------------------
def square_distance(src, dst):
    # src [B,S,3], dst [B,N,3] -> [B,S,N]
    return (jnp.sum(src ** 2, -1)[..., None]
            + jnp.sum(dst ** 2, -1)[:, None, :]
            - 2.0 * jnp.einsum('bsc,bnc->bsn', src, dst))


def farthest_point_sample(xyz, npoint):
    # TODO(synk): torch seeds `farthest` with randint; we start from index 0 deterministically.
    B, N, _ = xyz.shape
    batch_idx = jnp.arange(B)

    def body(i, carry):
        centroids, distance, farthest = carry
        centroids = centroids.at[:, i].set(farthest)
        centroid = xyz[batch_idx, farthest][:, None, :]              # [B,1,3]
        dist = jnp.sum((xyz - centroid) ** 2, -1)
        distance = jnp.minimum(distance, dist)
        farthest = jnp.argmax(distance, -1).astype(jnp.int32)
        return centroids, distance, farthest

    centroids = jnp.zeros((B, npoint), jnp.int32)
    distance = jnp.full((B, N), 1e10, jnp.float32)
    farthest = jnp.zeros((B,), jnp.int32)
    centroids, _, _ = jax.lax.fori_loop(0, npoint, body, (centroids, distance, farthest))
    return centroids


def index_points(points, idx):
    # points [B,N,C], idx [B,...] -> [B,...,C]
    return jax.vmap(lambda p, i: p[i])(points, idx)


def _group_features(xyz, points, npoint, nsample, cin_pp):
    """FPS + kNN + grouping. concat/pad happen on the small [B,N,*] table; one gather
    plus a fused subtract emits the padded grouped slab directly (no extra concat/pad
    round trip of the K x larger slab)."""
    S, K = npoint, nsample
    fps_idx = farthest_point_sample(xyz, S)                          # [B,S]
    new_xyz = index_points(xyz, fps_idx)                             # [B,S,3]
    dists = square_distance(new_xyz, xyz)                            # [B,S,N]
    _, idx = jax.lax.top_k(-dists, K)                                # kNN indices [B,S,K]

    cin = 3 + points.shape[-1]
    feat = jnp.concatenate([xyz, points], axis=-1)                   # [B,N,cin]  (small)
    feat = jnp.pad(feat, ((0, 0), (0, 0), (0, cin_pp - cin)))        # [B,N,cin_pp]
    center = jnp.pad(new_xyz, ((0, 0), (0, 0), (0, cin_pp - 3)))     # zeros for feature chans
    grouped = index_points(feat, idx) - center[:, :, None, :]        # [B,S,K,cin_pp]
    return new_xyz, grouped


def transition_down(xyz, points, npoint, nsample, params, c_out):
    """xyz [B,N,3], points [B,N,D] -> (new_xyz [B,S,3], new_points [B,S,c_out])."""
    (w1, b1), (w2, b2) = params
    cin_pp = w1.shape[0]
    B = xyz.shape[0]
    S, K = npoint, nsample

    new_xyz, grouped = _group_features(xyz, points, npoint, nsample, cin_pp)
    # Lane-packed slab: the K neighbors live in the lane axis -> [M, K*cin_pp].
    x_packed = grouped.reshape(B * S, K * cin_pp).astype(jnp.bfloat16)

    out = td_mlp_maxpool(x_packed, w1, b1, w2, b2, c_out, K, cin_pp)  # [B*S, c_out]
    return new_xyz, out.reshape(B, S, c_out)


def transition_down_reference(xyz, points, npoint, nsample, params, c_out):
    """Pure-JAX f32 reference (same grouping glue, unfused MLP) used for validation."""
    (w1, b1), (w2, b2) = params
    cin_pp = w1.shape[0]
    new_xyz, grouped = _group_features(xyz, points, npoint, nsample, cin_pp)
    h = jnp.maximum(jnp.einsum('bskc,cd->bskd', grouped, w1.astype(jnp.float32)) + b1[0], 0.0)
    h = jnp.maximum(jnp.einsum('bskd,de->bske', h, w2.astype(jnp.float32)) + b2[0], 0.0)
    return new_xyz, jnp.max(h, axis=2)[..., :c_out]


# ---------------------------------------------------------------------------
# Deterministic params: Conv2d(1x1) + BatchNorm2d(eval) folded into (W^T, b),
# BN scale folded INTO the weights, padded to the kernel layouts.
# ---------------------------------------------------------------------------
def init_params(key, channels, nsample, eps=1e-5):
    assert len(channels) == 3, "kernel is specialised to the 2-layer TransitionDown MLP"
    cin = channels[0]
    cin_pp = _pick_cin_pp(cin, nsample)
    pads = [cin_pp] + [_pad_channels(c) for c in channels[1:]]
    params = []
    last, last_p = cin, cin_pp
    for li, c_out in enumerate(channels[1:]):
        cp = pads[li + 1]
        key, k1, k2, k3, k4, k5 = jax.random.split(key, 6)
        w = 0.1 * jax.random.normal(k1, (last, c_out), jnp.float32)   # conv weight^T
        conv_b = 0.1 * jax.random.normal(k2, (c_out,), jnp.float32)
        gamma = 1.0 + 0.1 * jax.random.normal(k3, (c_out,), jnp.float32)
        beta = 0.1 * jax.random.normal(k4, (c_out,), jnp.float32)
        r_mean = 0.1 * jax.random.normal(k5, (c_out,), jnp.float32)
        r_var = jnp.ones((c_out,), jnp.float32)

        scale = gamma / jnp.sqrt(r_var + eps)
        w_fold = w * scale[None, :]                                   # fold BN scale into W
        b_fold = beta + scale * (conv_b - r_mean)                     # folded bias

        w_pad = jnp.zeros((last_p, cp), jnp.float32).at[:last, :c_out].set(w_fold)
        b_pad = jnp.zeros((1, cp), jnp.float32).at[:, :c_out].set(b_fold)
        params.append((w_pad.astype(jnp.bfloat16), b_pad))            # bf16 W, f32 bias
        last, last_p = c_out, cp
    return params, cin_pp


if __name__ == "__main__":
    key = jax.random.PRNGKey(0)
    B, N, D = 2, 16, 4
    npoint, nneighbor = 4, 8
    channels = [D + 3, 32, 32]   # TransitionDown(k=npoint, nneighbor, channels)

    kx, kp, kw = jax.random.split(key, 3)
    xyz = jax.random.normal(kx, (B, N, 3), jnp.float32)
    points = jax.random.normal(kp, (B, N, D), jnp.float32)
    params, _ = init_params(kw, channels, nneighbor)

    td = jax.jit(transition_down, static_argnums=(2, 3, 5))
    new_xyz, new_points = td(xyz, points, npoint, nneighbor, params, channels[-1])
    jax.block_until_ready((new_xyz, new_points))

    assert new_xyz.shape == (B, npoint, 3)
    assert new_points.shape == (B, npoint, channels[-1])

    # Validate the fused bf16 kernel path against an f32 pure-JAX reference.
    ref_xyz, ref_points = transition_down_reference(
        xyz, points, npoint, nneighbor, params, channels[-1])
    assert bool(jnp.allclose(new_xyz, ref_xyz, atol=1e-5))
    assert bool(jnp.allclose(new_points, ref_points, rtol=5e-2, atol=5e-2))
    print("KERNEL_OK")
</pallas_src>

<mosaic_0001>
module attributes {stable_mosaic.version = 11 : i64} {
  func.func @_td_mlp_kernel(%arg0: i32, %arg1: memref<8x128xbf16, #tpu.memory_space<vmem>>, %arg2: memref<16x32xbf16, #tpu.memory_space<vmem>>, %arg3: memref<1x32xf32, #tpu.memory_space<vmem>>, %arg4: memref<32x32xbf16, #tpu.memory_space<vmem>>, %arg5: memref<1x32xf32, #tpu.memory_space<vmem>>, %arg6: memref<8x32xf32, #tpu.memory_space<vmem>>) attributes {dimension_semantics = [#tpu.dimension_semantics<parallel>], iteration_bounds = array<i64: 1>, scalar_prefetch = 0 : i64, scratch_operands = 0 : i64, tpu.core_type = #tpu.core_type<tc>, window_params = [{transform_indices = @transform_0, window_bounds = array<i64: 8, 128>}, {pipeline_mode = #tpu.pipeline_mode<synchronous>, transform_indices = @transform_1, window_bounds = array<i64: 16, 32>}, {pipeline_mode = #tpu.pipeline_mode<synchronous>, transform_indices = @transform_2, window_bounds = array<i64: 1, 32>}, {pipeline_mode = #tpu.pipeline_mode<synchronous>, transform_indices = @transform_3, window_bounds = array<i64: 32, 32>}, {pipeline_mode = #tpu.pipeline_mode<synchronous>, transform_indices = @transform_4, window_bounds = array<i64: 1, 32>}, {transform_indices = @transform_5, window_bounds = array<i64: 8, 32>}]} {
    %c0 = arith.constant 0 : index
    %c0_0 = arith.constant 0 : index
    %0 = vector.load %arg2[%c0, %c0_0] : memref<16x32xbf16, #tpu.memory_space<vmem>>, vector<16x32xbf16>
    %c0_1 = arith.constant 0 : index
    %c0_2 = arith.constant 0 : index
    %1 = vector.load %arg3[%c0_1, %c0_2] : memref<1x32xf32, #tpu.memory_space<vmem>>, vector<1x32xf32>
    %c0_3 = arith.constant 0 : index
    %c0_4 = arith.constant 0 : index
    %2 = vector.load %arg4[%c0_3, %c0_4] : memref<32x32xbf16, #tpu.memory_space<vmem>>, vector<32x32xbf16>
    %c0_5 = arith.constant 0 : index
    %c0_6 = arith.constant 0 : index
    %3 = vector.load %arg5[%c0_5, %c0_6] : memref<1x32xf32, #tpu.memory_space<vmem>>, vector<1x32xf32>
    %c0_7 = arith.constant 0 : index
    %c0_8 = arith.constant 0 : index
    %4 = vector.load %arg1[%c0_7, %c0_8] : memref<8x128xbf16, #tpu.memory_space<vmem>>, vector<8x16xbf16>
    %cst = arith.constant dense<0.000000e+00> : vector<8x32xf32>
    %5 = tpu.matmul %4, %0, %cst {dimension_numbers = #tpu.dot_dimension_numbers<[1], [0], [0], [1], [0, 0, 1, 1], [], []>} : vector<8x16xbf16>, vector<16x32xbf16>, vector<8x32xf32> -> vector<8x32xf32>
    %6 = vector.broadcast %1 : vector<1x32xf32> to vector<8x32xf32>
    %7 = arith.addf %5, %6 : vector<8x32xf32>
    %cst_9 = arith.constant 0.000000e+00 : f32
    %8 = vector.broadcast %cst_9 : f32 to vector<8x32xf32>
    %9 = arith.maximumf %7, %8 : vector<8x32xf32>
    %10 = arith.truncf %9 : vector<8x32xf32> to vector<8x32xbf16>
    %cst_10 = arith.constant dense<0.000000e+00> : vector<8x32xf32>
    %11 = tpu.matmul %10, %2, %cst_10 {dimension_numbers = #tpu.dot_dimension_numbers<[1], [0], [0], [1], [0, 0, 1, 1], [], []>} : vector<8x32xbf16>, vector<32x32xbf16>, vector<8x32xf32> -> vector<8x32xf32>
    %12 = vector.broadcast %3 : vector<1x32xf32> to vector<8x32xf32>
    %13 = arith.addf %11, %12 : vector<8x32xf32>
    %cst_11 = arith.constant 0.000000e+00 : f32
    %14 = vector.broadcast %cst_11 : f32 to vector<8x32xf32>
    %15 = arith.maximumf %13, %14 : vector<8x32xf32>
    %c0_12 = arith.constant 0 : index
    %c16 = arith.constant 16 : index
    %16 = vector.load %arg1[%c0_12, %c16] : memref<8x128xbf16, #tpu.memory_space<vmem>>, vector<8x16xbf16>
    %cst_13 = arith.constant dense<0.000000e+00> : vector<8x32xf32>
    %17 = tpu.matmul %16, %0, %cst_13 {dimension_numbers = #tpu.dot_dimension_numbers<[1], [0], [0], [1], [0, 0, 1, 1], [], []>} : vector<8x16xbf16>, vector<16x32xbf16>, vector<8x32xf32> -> vector<8x32xf32>
    %18 = vector.broadcast %1 : vector<1x32xf32> to vector<8x32xf32>
    %19 = arith.addf %17, %18 : vector<8x32xf32>
    %cst_14 = arith.constant 0.000000e+00 : f32
    %20 = vector.broadcast %cst_14 : f32 to vector<8x32xf32>
    %21 = arith.maximumf %19, %20 : vector<8x32xf32>
    %22 = arith.truncf %21 : vector<8x32xf32> to vector<8x32xbf16>
    %cst_15 = arith.constant dense<0.000000e+00> : vector<8x32xf32>
    %23 = tpu.matmul %22, %2, %cst_15 {dimension_numbers = #tpu.dot_dimension_numbers<[1], [0], [0], [1], [0, 0, 1, 1], [], []>} : vector<8x32xbf16>, vector<32x32xbf16>, vector<8x32xf32> -> vector<8x32xf32>
    %24 = vector.broadcast %3 : vector<1x32xf32> to vector<8x32xf32>
    %25 = arith.addf %23, %24 : vector<8x32xf32>
    %cst_16 = arith.constant 0.000000e+00 : f32
    %26 = vector.broadcast %cst_16 : f32 to vector<8x32xf32>
    %27 = arith.maximumf %25, %26 : vector<8x32xf32>
    %28 = arith.maximumf %15, %27 : vector<8x32xf32>
    %c0_17 = arith.constant 0 : index
    %c32 = arith.constant 32 : index
    %29 = vector.load %arg1[%c0_17, %c32] : memref<8x128xbf16, #tpu.memory_space<vmem>>, vector<8x16xbf16>
    %cst_18 = arith.constant dense<0.000000e+00> : vector<8x32xf32>
    %30 = tpu.matmul %29, %0, %cst_18 {dimension_numbers = #tpu.dot_dimension_numbers<[1], [0], [0], [1], [0, 0, 1, 1], [], []>} : vector<8x16xbf16>, vector<16x32xbf16>, vector<8x32xf32> -> vector<8x32xf32>
    %31 = vector.broadcast %1 : vector<1x32xf32> to vector<8x32xf32>
    %32 = arith.addf %30, %31 : vector<8x32xf32>
    %cst_19 = arith.constant 0.000000e+00 : f32
    %33 = vector.broadcast %cst_19 : f32 to vector<8x32xf32>
    %34 = arith.maximumf %32, %33 : vector<8x32xf32>
    %35 = arith.truncf %34 : vector<8x32xf32> to vector<8x32xbf16>
    %cst_20 = arith.constant dense<0.000000e+00> : vector<8x32xf32>
    %36 = tpu.matmul %35, %2, %cst_20 {dimension_numbers = #tpu.dot_dimension_numbers<[1], [0], [0], [1], [0, 0, 1, 1], [], []>} : vector<8x32xbf16>, vector<32x32xbf16>, vector<8x32xf32> -> vector<8x32xf32>
    %37 = vector.broadcast %3 : vector<1x32xf32> to vector<8x32xf32>
    %38 = arith.addf %36, %37 : vector<8x32xf32>
    %cst_21 = arith.constant 0.000000e+00 : f32
    %39 = vector.broadcast %cst_21 : f32 to vector<8x32xf32>
    %40 = arith.maximumf %38, %39 : vector<8x32xf32>
    %41 = arith.maximumf %28, %40 : vector<8x32xf32>
    %c0_22 = arith.constant 0 : index
    %c48 = arith.constant 48 : index
    %42 = vector.load %arg1[%c0_22, %c48] : memref<8x128xbf16, #tpu.memory_space<vmem>>, vector<8x16xbf16>
    %cst_23 = arith.constant dense<0.000000e+00> : vector<8x32xf32>
    %43 = tpu.matmul %42, %0, %cst_23 {dimension_numbers = #tpu.dot_dimension_numbers<[1], [0], [0], [1], [0, 0, 1, 1], [], []>} : vector<8x16xbf16>, vector<16x32xbf16>, vector<8x32xf32> -> vector<8x32xf32>
    %44 = vector.broadcast %1 : vector<1x32xf32> to vector<8x32xf32>
    %45 = arith.addf %43, %44 : vector<8x32xf32>
    %cst_24 = arith.constant 0.000000e+00 : f32
    %46 = vector.broadcast %cst_24 : f32 to vector<8x32xf32>
    %47 = arith.maximumf %45, %46 : vector<8x32xf32>
    %48 = arith.truncf %47 : vector<8x32xf32> to vector<8x32xbf16>
    %cst_25 = arith.constant dense<0.000000e+00> : vector<8x32xf32>
    %49 = tpu.matmul %48, %2, %cst_25 {dimension_numbers = #tpu.dot_dimension_numbers<[1], [0], [0], [1], [0, 0, 1, 1], [], []>} : vector<8x32xbf16>, vector<32x32xbf16>, vector<8x32xf32> -> vector<8x32xf32>
    %50 = vector.broadcast %3 : vector<1x32xf32> to vector<8x32xf32>
    %51 = arith.addf %49, %50 : vector<8x32xf32>
    %cst_26 = arith.constant 0.000000e+00 : f32
    %52 = vector.broadcast %cst_26 : f32 to vector<8x32xf32>
    %53 = arith.maximumf %51, %52 : vector<8x32xf32>
    %54 = arith.maximumf %41, %53 : vector<8x32xf32>
    %c0_27 = arith.constant 0 : index
    %c64 = arith.constant 64 : index
    %55 = vector.load %arg1[%c0_27, %c64] : memref<8x128xbf16, #tpu.memory_space<vmem>>, vector<8x16xbf16>
    %cst_28 = arith.constant dense<0.000000e+00> : vector<8x32xf32>
    %56 = tpu.matmul %55, %0, %cst_28 {dimension_numbers = #tpu.dot_dimension_numbers<[1], [0], [0], [1], [0, 0, 1, 1], [], []>} : vector<8x16xbf16>, vector<16x32xbf16>, vector<8x32xf32> -> vector<8x32xf32>
    %57 = vector.broadcast %1 : vector<1x32xf32> to vector<8x32xf32>
    %58 = arith.addf %56, %57 : vector<8x32xf32>
    %cst_29 = arith.constant 0.000000e+00 : f32
    %59 = vector.broadcast %cst_29 : f32 to vector<8x32xf32>
    %60 = arith.maximumf %58, %59 : vector<8x32xf32>
    %61 = arith.truncf %60 : vector<8x32xf32> to vector<8x32xbf16>
    %cst_30 = arith.constant dense<0.000000e+00> : vector<8x32xf32>
    %62 = tpu.matmul %61, %2, %cst_30 {dimension_numbers = #tpu.dot_dimension_numbers<[1], [0], [0], [1], [0, 0, 1, 1], [], []>} : vector<8x32xbf16>, vector<32x32xbf16>, vector<8x32xf32> -> vector<8x32xf32>
    %63 = vector.broadcast %3 : vector<1x32xf32> to vector<8x32xf32>
    %64 = arith.addf %62, %63 : vector<8x32xf32>
    %cst_31 = arith.constant 0.000000e+00 : f32
    %65 = vector.broadcast %cst_31 : f32 to vector<8x32xf32>
    %66 = arith.maximumf %64, %65 : vector<8x32xf32>
    %67 = arith.maximumf %54, %66 : vector<8x32xf32>
    %c0_32 = arith.constant 0 : index
    %c80 = arith.constant 80 : index
    %68 = vector.load %arg1[%c0_32, %c80] : memref<8x128xbf16, #tpu.memory_space<vmem>>, vector<8x16xbf16>
    %cst_33 = arith.constant dense<0.000000e+00> : vector<8x32xf32>
    %69 = tpu.matmul %68, %0, %cst_33 {dimension_numbers = #tpu.dot_dimension_numbers<[1], [0], [0], [1], [0, 0, 1, 1], [], []>} : vector<8x16xbf16>, vector<16x32xbf16>, vector<8x32xf32> -> vector<8x32xf32>
    %70 = vector.broadcast %1 : vector<1x32xf32> to vector<8x32xf32>
    %71 = arith.addf %69, %70 : vector<8x32xf32>
    %cst_34 = arith.constant 0.000000e+00 : f32
    %72 = vector.broadcast %cst_34 : f32 to vector<8x32xf32>
    %73 = arith.maximumf %71, %72 : vector<8x32xf32>
    %74 = arith.truncf %73 : vector<8x32xf32> to vector<8x32xbf16>
    %cst_35 = arith.constant dense<0.000000e+00> : vector<8x32xf32>
    %75 = tpu.matmul %74, %2, %cst_35 {dimension_numbers = #tpu.dot_dimension_numbers<[1], [0], [0], [1], [0, 0, 1, 1], [], []>} : vector<8x32xbf16>, vector<32x32xbf16>, vector<8x32xf32> -> vector<8x32xf32>
    %76 = vector.broadcast %3 : vector<1x32xf32> to vector<8x32xf32>
    %77 = arith.addf %75, %76 : vector<8x32xf32>
    %cst_36 = arith.constant 0.000000e+00 : f32
    %78 = vector.broadcast %cst_36 : f32 to vector<8x32xf32>
    %79 = arith.maximumf %77, %78 : vector<8x32xf32>
    %80 = arith.maximumf %67, %79 : vector<8x32xf32>
    %c0_37 = arith.constant 0 : index
    %c96 = arith.constant 96 : index
    %81 = vector.load %arg1[%c0_37, %c96] : memref<8x128xbf16, #tpu.memory_space<vmem>>, vector<8x16xbf16>
    %cst_38 = arith.constant dense<0.000000e+00> : vector<8x32xf32>
    %82 = tpu.matmul %81, %0, %cst_38 {dimension_numbers = #tpu.dot_dimension_numbers<[1], [0], [0], [1], [0, 0, 1, 1], [], []>} : vector<8x16xbf16>, vector<16x32xbf16>, vector<8x32xf32> -> vector<8x32xf32>
    %83 = vector.broadcast %1 : vector<1x32xf32> to vector<8x32xf32>
    %84 = arith.addf %82, %83 : vector<8x32xf32>
    %cst_39 = arith.constant 0.000000e+00 : f32
    %85 = vector.broadcast %cst_39 : f32 to vector<8x32xf32>
    %86 = arith.maximumf %84, %85 : vector<8x32xf32>
    %87 = arith.truncf %86 : vector<8x32xf32> to vector<8x32xbf16>
    %cst_40 = arith.constant dense<0.000000e+00> : vector<8x32xf32>
    %88 = tpu.matmul %87, %2, %cst_40 {dimension_numbers = #tpu.dot_dimension_numbers<[1], [0], [0], [1], [0, 0, 1, 1], [], []>} : vector<8x32xbf16>, vector<32x32xbf16>, vector<8x32xf32> -> vector<8x32xf32>
    %89 = vector.broadcast %3 : vector<1x32xf32> to vector<8x32xf32>
    %90 = arith.addf %88, %89 : vector<8x32xf32>
    %cst_41 = arith.constant 0.000000e+00 : f32
    %91 = vector.broadcast %cst_41 : f32 to vector<8x32xf32>
    %92 = arith.maximumf %90, %91 : vector<8x32xf32>
    %93 = arith.maximumf %80, %92 : vector<8x32xf32>
    %c0_42 = arith.constant 0 : index
    %c112 = arith.constant 112 : index
    %94 = vector.load %arg1[%c0_42, %c112] : memref<8x128xbf16, #tpu.memory_space<vmem>>, vector<8x16xbf16>
    %cst_43 = arith.constant dense<0.000000e+00> : vector<8x32xf32>
    %95 = tpu.matmul %94, %0, %cst_43 {dimension_numbers = #tpu.dot_dimension_numbers<[1], [0], [0], [1], [0, 0, 1, 1], [], []>} : vector<8x16xbf16>, vector<16x32xbf16>, vector<8x32xf32> -> vector<8x32xf32>
    %96 = vector.broadcast %1 : vector<1x32xf32> to vector<8x32xf32>
    %97 = arith.addf %95, %96 : vector<8x32xf32>
    %cst_44 = arith.constant 0.000000e+00 : f32
    %98 = vector.broadcast %cst_44 : f32 to vector<8x32xf32>
    %99 = arith.maximumf %97, %98 : vector<8x32xf32>
    %100 = arith.truncf %99 : vector<8x32xf32> to vector<8x32xbf16>
    %cst_45 = arith.constant dense<0.000000e+00> : vector<8x32xf32>
    %101 = tpu.matmul %100, %2, %cst_45 {dimension_numbers = #tpu.dot_dimension_numbers<[1], [0], [0], [1], [0, 0, 1, 1], [], []>} : vector<8x32xbf16>, vector<32x32xbf16>, vector<8x32xf32> -> vector<8x32xf32>
    %102 = vector.broadcast %3 : vector<1x32xf32> to vector<8x32xf32>
    %103 = arith.addf %101, %102 : vector<8x32xf32>
    %cst_46 = arith.constant 0.000000e+00 : f32
    %104 = vector.broadcast %cst_46 : f32 to vector<8x32xf32>
    %105 = arith.maximumf %103, %104 : vector<8x32xf32>
    %106 = arith.maximumf %93, %105 : vector<8x32xf32>
    %c0_47 = arith.constant 0 : index
    %c0_48 = arith.constant 0 : index
    %107 = vector.load %arg6[%c0_47, %c0_48] : memref<8x32xf32, #tpu.memory_space<vmem>>, vector<8x32xf32>
    tpu.vector_store %arg6[%c0_47, %c0_48], %106 {strides = array<i32>} : memref<8x32xf32, #tpu.memory_space<vmem>>, vector<8x32xf32>,
    return
  }
  func.func @transform_0(%arg0: i32) -> (i32, i32) {
    %c0_i32 = arith.constant 0 : i32
    %c0_i32_0 = arith.constant 0 : i32
    return %arg0, %c0_i32 : i32, i32
  }
  func.func @transform_1(%arg0: i32) -> (i32, i32) {
    %c0_i32 = arith.constant 0 : i32
    %c0_i32_0 = arith.constant 0 : i32
    %c0_i32_1 = arith.constant 0 : i32
    return %c0_i32, %c0_i32_0 : i32, i32
  }
  func.func @transform_2(%arg0: i32) -> (i32, i32) {
    %c0_i32 = arith.constant 0 : i32
    %c0_i32_0 = arith.constant 0 : i32
    %c0_i32_1 = arith.constant 0 : i32
    return %c0_i32, %c0_i32_0 : i32, i32
  }
  func.func @transform_3(%arg0: i32) -> (i32, i32) {
    %c0_i32 = arith.constant 0 : i32
    %c0_i32_0 = arith.constant 0 : i32
    %c0_i32_1 = arith.constant 0 : i32
    return %c0_i32, %c0_i32_0 : i32, i32
  }
  func.func @transform_4(%arg0: i32) -> (i32, i32) {
    %c0_i32 = arith.constant 0 : i32
    %c0_i32_0 = arith.constant 0 : i32
    %c0_i32_1 = arith.constant 0 : i32
    return %c0_i32, %c0_i32_0 : i32, i32
  }
  func.func @transform_5(%arg0: i32) -> (i32, i32) {
    %c0_i32 = arith.constant 0 : i32
    %c0_i32_0 = arith.constant 0 : i32
    return %arg0, %c0_i32 : i32, i32
  }
}

</mosaic_0001>

<llo_original>
// kernel: custom-call.6
$region0: #{custom-call.6}
  %s0 = inlined_call_operand.vmem [shape: f32[2,16], index: 0, kind: output, shape index: {}]

// kernel: transition_down.1
$region0: #{transition_down.1}
  #allocation0 [shape = 'u32[]', space=smem, size = 0x4, offset = 0x4, fixed_abs, tag = 'smem constant byte address 0x4 - core index']
  #allocation1 [shape = 'u32[144,128]{1,0:T(1,128)}', space=vmem, size = 0x12000, scoped, tag = 'internal scratch']
  %s0 = inlined_call_operand.vmem [shape: bf16[8,128], index: 0, kind: input, shape index: {}]
  %s1 = inlined_call_operand.vmem [shape: bf16[16,32], index: 1, kind: input, shape index: {}]
  %s2 = inlined_call_operand.vmem [shape: f32[1,32], index: 2, kind: input, shape index: {}]
  %s3 = inlined_call_operand.vmem [shape: bf16[32,32], index: 3, kind: input, shape index: {}]
  %s4 = inlined_call_operand.vmem [shape: f32[1,32], index: 4, kind: input, shape index: {}]
  %s5 = inlined_call_operand.hbm [shape: f32[8,32], index: 5, kind: output, shape index: {}]
  %s6 = sld [smem:[#allocation0]]
  $region30: #{transition_down.1} parent=0
    _
  %s8 = ssub.s32 1, %s6
  %s9 = scalar_select 0, %s8, %s6
  $region1: #{transition_down.1} parent=0
    #allocation2 [shape = 'u8[4096]{0}', space=vmem, size = 0x1000, scoped, tag = 'output window, operand 0, single buffered']
    #allocation3 [shape = 's32[1]{0}', space=sflag, size = 0x4, scoped, tag = 'scoped memory for transition_down.1']
    %10 = vsyncpa [#allocation3], 0
    // Predicated region
    $region2: #{transition_down.1} parent=1 // pred_check
      _
    $region3: #{transition_down.1} parent=1 // pred_check_branch
      %12 = sbr.rel (0) target = $region5
    $region4: #{transition_down.1} parent=1 // pred_region
      _
    $region5: #{transition_down.1} parent=1 // pred_fallthru
      _
    // Predicated region
    $region6: #{transition_down.1} parent=1 // pred_check
      _
    $region7: #{transition_down.1} parent=1 // pred_check_branch
      %14 = sbr.rel (0) target = $region9
    $region8: #{transition_down.1} parent=1 // pred_region
      _
    $region9: #{transition_down.1} parent=1 // pred_fallthru
      _
    // Predicated region
    $region10: #{transition_down.1} parent=1 // pred_check
      _
    $region11: #{transition_down.1} parent=1 // pred_check_branch
      %16 = sbr.rel (0) target = $region13
    $region12: #{transition_down.1} parent=1 // pred_region
      _
    $region13: #{transition_down.1} parent=1 // pred_fallthru
      _
    // Predicated region
    $region14: #{transition_down.1} parent=1 // pred_check
      _
    $region15: #{transition_down.1} parent=1 // pred_check_branch
      %18 = sbr.rel (0) target = $region17
    $region16: #{transition_down.1} parent=1 // pred_region
      _
    $region17: #{transition_down.1} parent=1 // pred_fallthru
      _
    // Predicated region
    $region18: #{transition_down.1} parent=1 // pred_check
      _
    $region19: #{transition_down.1} parent=1 // pred_check_branch
      %20 = sbr.rel (0) target = $region21
    $region20: #{transition_down.1} parent=1 // pred_region
      _
    $region21: #{transition_down.1} parent=1 // pred_fallthru
      _
    %v22 = vld [vmem:[%s1] sm:$0xf]
    %v23 = vld [vmem:[%s1 + $0x4] sm:$0xf]
    %v24 = vld [vmem:[%s2] sm:$0x1]
    %v25 = vld [vmem:[%s3] sm:$0xf]
    %v26 = vld [vmem:[%s3 + $0x4] sm:$0xf]
    %v27 = vld [vmem:[%s3 + $0x8] sm:$0xf]
    %v28 = vld [vmem:[%s3 + $0xc] sm:$0xf]
    %v29 = vld [vmem:[%s4] sm:$0x1]
    %v30 = vld [vmem:[%s0] sm:$0xf]
    %v32 = vlaneseq
    %v33 = vshrl.u32 %v32, 7
    %v34 = vsub.s32 0, %v33
    %v35 = vrot.slane %v24, %v34
    %v39 = vunpack.c.l.b16 %v22
    %v40 = vunpack.c.l.b16 %v23
    %v41 = vpack.c.b16 %v40, %v39
    %vm43 = vcmask 130048
    %v45 = vsel %vm43, %v30, 0
    %47 = vmatprep.subr.bf16.mxu0 0
    %48 = vmatpush1.bf16.msra.mxu0 %v41
    %49 = vmatprep.subr.bf16.mxu0 0
    %50 = vmatpush1.bf16.msra.mxu0 0
    %51 = vmatprep.subr.bf16.mxu0 0
    %52 = vmatpush1.bf16.msra.mxu0 0
    %53 = vmatprep.subr.bf16.mxu0 0
    %54 = vmatpush1.bf16.msra.mxu0 0
    %55 = vmatprep.subr.bf16.mxu0 0
    %56 = vmatpush1.bf16.msra.mxu0 0
    %57 = vmatprep.subr.bf16.mxu0 0
    %58 = vmatpush1.bf16.msra.mxu0 0
    %59 = vmatprep.subr.bf16.mxu0 0
    %60 = vmatpush1.bf16.msra.mxu0 0
    %61 = vmatprep.subr.bf16.mxu0 0
    %62 = vmatpush1.bf16.msra.mxu0 0
    %63 = vmatprep.subr.bf16.mxu0 0
    %64 = vmatpush1.bf16.msra.mxu0 0
    %65 = vmatprep.subr.bf16.mxu0 0
    %66 = vmatpush1.bf16.msra.mxu0 0
    %67 = vmatprep.subr.bf16.mxu0 0
    %68 = vmatpush1.bf16.msra.mxu0 0
    %69 = vmatprep.subr.bf16.mxu0 0
    %70 = vmatpush1.bf16.msra.mxu0 0
    %71 = vmatprep.subr.bf16.mxu0 0
    %72 = vmatpush1.bf16.msra.mxu0 0
    %73 = vmatprep.subr.bf16.mxu0 0
    %74 = vmatpush1.bf16.msra.mxu0 0
    %75 = vmatprep.subr.bf16.mxu0 0
    %76 = vmatpush1.bf16.msra.mxu0 0
    %77 = vmatprep.subr.bf16.mxu0 0
    %78 = vmatpush1.bf16.msra.mxu0 0
    %79 = vmatprep.mubr.bf16.mxu0 0
    %80 = vmatmul.mubr.bf16.gmra.mrb[0].mxu0 %v45
    %v81 = vpop.f32.mrb[0].mxu0
    %v82 = vadd.f32 %v35, %v81
    %v83 = vpop.f32.mrb[0].mxu0
    %v84 = vpop.f32.mrb[0].mxu0
    %v85 = vpop.f32.mrb[0].mxu0
    %86 = vdwg.mxu0
    %v87 = vmax.f32 %v82, 0.0
    %v88 = vpack.c.bf16 %v87, %v87
    %v90 = vlaneseq
    %v91 = vshrl.u32 %v90, 7
    %v92 = vsub.s32 0, %v91
    %v93 = vrot.slane %v29, %v92
    %v99 = vunpack.c.l.b16 %v25
    %v100 = vunpack.c.l.b16 %v26
    %v101 = vunpack.c.l.b16 %v27
    %v102 = vunpack.c.l.b16 %v28
    %v103 = vpack.c.b16 %v100, %v99
    %v104 = vpack.c.b16 %v102, %v101
    %vm107 = vcmask 261120
    %v109 = vsel %vm107, %v88, 0
    %111 = vmatprep.subr.bf16.mxu0 0
    %112 = vmatpush1.bf16.msra.mxu0 %v103
    %113 = vmatprep.subr.bf16.mxu0 0
    %114 = vmatpush1.bf16.msra.mxu0 %v104
    %115 = vmatprep.subr.bf16.mxu0 0
    %116 = vmatpush1.bf16.msra.mxu0 0
    %117 = vmatprep.subr.bf16.mxu0 0
    %118 = vmatpush1.bf16.msra.mxu0 0
    %119 = vmatprep.subr.bf16.mxu0 0
    %120 = vmatpush1.bf16.msra.mxu0 0
    %121 = vmatprep.subr.bf16.mxu0 0
    %122 = vmatpush1.bf16.msra.mxu0 0
    %123 = vmatprep.subr.bf16.mxu0 0
    %124 = vmatpush1.bf16.msra.mxu0 0
    %125 = vmatprep.subr.bf16.mxu0 0
    %126 = vmatpush1.bf16.msra.mxu0 0
    %127 = vmatprep.subr.bf16.mxu0 0
    %128 = vmatpush1.bf16.msra.mxu0 0
    %129 = vmatprep.subr.bf16.mxu0 0
    %130 = vmatpush1.bf16.msra.mxu0 0
    %131 = vmatprep.subr.bf16.mxu0 0
    %132 = vmatpush1.bf16.msra.mxu0 0
    %133 = vmatprep.subr.bf16.mxu0 0
    %134 = vmatpush1.bf16.msra.mxu0 0
    %135 = vmatprep.subr.bf16.mxu0 0
    %136 = vmatpush1.bf16.msra.mxu0 0
    %137 = vmatprep.subr.bf16.mxu0 0
    %138 = vmatpush1.bf16.msra.mxu0 0
    %139 = vmatprep.subr.bf16.mxu0 0
    %140 = vmatpush1.bf16.msra.mxu0 0
    %141 = vmatprep.subr.bf16.mxu0 0
    %142 = vmatpush1.bf16.msra.mxu0 0
    %143 = vmatprep.mubr.bf16.mxu0 0
    %144 = vmatmul.mubr.bf16.gmra.mrb[0].mxu0 %v109
    %v145 = vpop.f32.mrb[0].mxu0
    %v146 = vadd.f32 %v93, %v145
    %v147 = vpop.f32.mrb[0].mxu0
    %v148 = vpop.f32.mrb[0].mxu0
    %v149 = vpop.f32.mrb[0].mxu0
    %150 = vdwg.mxu0
    %v151 = vmax.f32 %v146, 0.0
    %v153 = vunpack.c.l.b16 %v30
    %v154 = vpack.c.b16 %v153, %v153
    %155 = vrot.lane.b32.xlu0 %v154, 112
    %v156 = vpop.permute.xlu0 %155
    %v158 = vsel %vm43, %v156, 0
    %160 = vmatprep.subr.bf16.mxu0 0
    %161 = vmatpush1.bf16.msra.mxu0 %v41
    %162 = vmatprep.subr.bf16.mxu0 0
    %163 = vmatpush1.bf16.msra.mxu0 0
    %164 = vmatprep.subr.bf16.mxu0 0
    %165 = vmatpush1.bf16.msra.mxu0 0
    %166 = vmatprep.subr.bf16.mxu0 0
    %167 = vmatpush1.bf16.msra.mxu0 0
    %168 = vmatprep.subr.bf16.mxu0 0
    %169 = vmatpush1.bf16.msra.mxu0 0
    %170 = vmatprep.subr.bf16.mxu0 0
    %171 = vmatpush1.bf16.msra.mxu0 0
    %172 = vmatprep.subr.bf16.mxu0 0
    %173 = vmatpush1.bf16.msra.mxu0 0
    %174 = vmatprep.subr.bf16.mxu0 0
    %175 = vmatpush1.bf16.msra.mxu0 0
    %176 = vmatprep.subr.bf16.mxu0 0
    %177 = vmatpush1.bf16.msra.mxu0 0
    %178 = vmatprep.subr.bf16.mxu0 0
    %179 = vmatpush1.bf16.msra.mxu0 0
    %180 = vmatprep.subr.bf16.mxu0 0
    %181 = vmatpush1.bf16.msra.mxu0 0
    %182 = vmatprep.subr.bf16.mxu0 0
    %183 = vmatpush1.bf16.msra.mxu0 0
    %184 = vmatprep.subr.bf16.mxu0 0
    %185 = vmatpush1.bf16.msra.mxu0 0
    %186 = vmatprep.subr.bf16.mxu0 0
    %187 = vmatpush1.bf16.msra.mxu0 0
    %188 = vmatprep.subr.bf16.mxu0 0
    %189 = vmatpush1.bf16.msra.mxu0 0
    %190 = vmatprep.subr.bf16.mxu0 0
    %191 = vmatpush1.bf16.msra.mxu0 0
    %192 = vmatprep.mubr.bf16.mxu0 0
    %193 = vmatmul.mubr.bf16.gmra.mrb[0].mxu0 %v158
    %v194 = vpop.f32.mrb[0].mxu0
    %v195 = vadd.f32 %v35, %v194
    %v196 = vpop.f32.mrb[0].mxu0
    %v197 = vpop.f32.mrb[0].mxu0
    %v198 = vpop.f32.mrb[0].mxu0
    %199 = vdwg.mxu0
    %v200 = vmax.f32 %v195, 0.0
    %v201 = vpack.c.bf16 %v200, %v200
    %v203 = vsel %vm107, %v201, 0
    %205 = vmatprep.subr.bf16.mxu0 0
    %206 = vmatpush1.bf16.msra.mxu0 %v103
    %207 = vmatprep.subr.bf16.mxu0 0
    %208 = vmatpush1.bf16.msra.mxu0 %v104
    %209 = vmatprep.subr.bf16.mxu0 0
    %210 = vmatpush1.bf16.msra.mxu0 0
    %211 = vmatprep.subr.bf16.mxu0 0
    %212 = vmatpush1.bf16.msra.mxu0 0
    %213 = vmatprep.subr.bf16.mxu0 0
    %214 = vmatpush1.bf16.msra.mxu0 0
    %215 = vmatprep.subr.bf16.mxu0 0
    %216 = vmatpush1.bf16.msra.mxu0 0
    %217 = vmatprep.subr.bf16.mxu0 0
    %218 = vmatpush1.bf16.msra.mxu0 0
    %219 = vmatprep.subr.bf16.mxu0 0
    %220 = vmatpush1.bf16.msra.mxu0 0
    %221 = vmatprep.subr.bf16.mxu0 0
    %222 = vmatpush1.bf16.msra.mxu0 0
    %223 = vmatprep.subr.bf16.mxu0 0
    %224 = vmatpush1.bf16.msra.mxu0 0
    %225 = vmatprep.subr.bf16.mxu0 0
    %226 = vmatpush1.bf16.msra.mxu0 0
    %227 = vmatprep.subr.bf16.mxu0 0
    %228 = vmatpush1.bf16.msra.mxu0 0
    %229 = vmatprep.subr.bf16.mxu0 0
    %230 = vmatpush1.bf16.msra.mxu0 0
    %231 = vmatprep.subr.bf16.mxu0 0
    %232 = vmatpush1.bf16.msra.mxu0 0
    %233 = vmatprep.subr.bf16.mxu0 0
    %234 = vmatpush1.bf16.msra.mxu0 0
    %235 = vmatprep.subr.bf16.mxu0 0
    %236 = vmatpush1.bf16.msra.mxu0 0
    %237 = vmatprep.mubr.bf16.mxu0 0
    %238 = vmatmul.mubr.bf16.gmra.mrb[0].mxu0 %v203
    %v239 = vpop.f32.mrb[0].mxu0
    %v240 = vadd.f32 %v93, %v239
    %v241 = vpop.f32.mrb[0].mxu0
    %v242 = vpop.f32.mrb[0].mxu0
    %v243 = vpop.f32.mrb[0].mxu0
    %244 = vdwg.mxu0
    %v245 = vmax.f32 %v240, 0.0
    %v246 = vmax.f32 %v151, %v245
    %247 = vrot.lane.b32.xlu0 %v154, 96
    %v248 = vpop.permute.xlu0 %247
    %v250 = vsel %vm43, %v248, 0
    %252 = vmatprep.subr.bf16.mxu0 0
    %253 = vmatpush1.bf16.msra.mxu0 %v41
    %254 = vmatprep.subr.bf16.mxu0 0
    %255 = vmatpush1.bf16.msra.mxu0 0
    %256 = vmatprep.subr.bf16.mxu0 0
    %257 = vmatpush1.bf16.msra.mxu0 0
    %258 = vmatprep.subr.bf16.mxu0 0
    %259 = vmatpush1.bf16.msra.mxu0 0
    %260 = vmatprep.subr.bf16.mxu0 0
    %261 = vmatpush1.bf16.msra.mxu0 0
    %262 = vmatprep.subr.bf16.mxu0 0
    %263 = vmatpush1.bf16.msra.mxu0 0
    %264 = vmatprep.subr.bf16.mxu0 0
    %265 = vmatpush1.bf16.msra.mxu0 0
    %266 = vmatprep.subr.bf16.mxu0 0
    %267 = vmatpush1.bf16.msra.mxu0 0
    %268 = vmatprep.subr.bf16.mxu0 0
    %269 = vmatpush1.bf16.msra.mxu0 0
    %270 = vmatprep.subr.bf16.mxu0 0
    %271 = vmatpush1.bf16.msra.mxu0 0
    %272 = vmatprep.subr.bf16.mxu0 0
    %273 = vmatpush1.bf16.msra.mxu0 0
    %274 = vmatprep.subr.bf16.mxu0 0
    %275 = vmatpush1.bf16.msra.mxu0 0
    %276 = vmatprep.subr.bf16.mxu0 0
    %277 = vmatpush1.bf16.msra.mxu0 0
    %278 = vmatprep.subr.bf16.mxu0 0
    %279 = vmatpush1.bf16.msra.mxu0 0
    %280 = vmatprep.subr.bf16.mxu0 0
    %281 = vmatpush1.bf16.msra.mxu0 0
    %282 = vmatprep.subr.bf16.mxu0 0
    %283 = vmatpush1.bf16.msra.mxu0 0
    %284 = vmatprep.mubr.bf16.mxu0 0
    %285 = vmatmul.mubr.bf16.gmra.mrb[0].mxu0 %v250
    %v286 = vpop.f32.mrb[0].mxu0
    %v287 = vadd.f32 %v35, %v286
    %v288 = vpop.f32.mrb[0].mxu0
    %v289 = vpop.f32.mrb[0].mxu0
    %v290 = vpop.f32.mrb[0].mxu0
    %291 = vdwg.mxu0
    %v292 = vmax.f32 %v287, 0.0
    %v293 = vpack.c.bf16 %v292, %v292
    %v295 = vsel %vm107, %v293, 0
    %297 = vmatprep.subr.bf16.mxu0 0
    %298 = vmatpush1.bf16.msra.mxu0 %v103
    %299 = vmatprep.subr.bf16.mxu0 0
    %300 = vmatpush1.bf16.msra.mxu0 %v104
    %301 = vmatprep.subr.bf16.mxu0 0
    %302 = vmatpush1.bf16.msra.mxu0 0
    %303 = vmatprep.subr.bf16.mxu0 0
    %304 = vmatpush1.bf16.msra.mxu0 0
    %305 = vmatprep.subr.bf16.mxu0 0
    %306 = vmatpush1.bf16.msra.mxu0 0
    %307 = vmatprep.subr.bf16.mxu0 0
    %308 = vmatpush1.bf16.msra.mxu0 0
    %309 = vmatprep.subr.bf16.mxu0 0
    %310 = vmatpush1.bf16.msra.mxu0 0
    %311 = vmatprep.subr.bf16.mxu0 0
    %312 = vmatpush1.bf16.msra.mxu0 0
    %313 = vmatprep.subr.bf16.mxu0 0
    %314 = vmatpush1.bf16.msra.mxu0 0
    %315 = vmatprep.subr.bf16.mxu0 0
    %316 = vmatpush1.bf16.msra.mxu0 0
    %317 = vmatprep.subr.bf16.mxu0 0
    %318 = vmatpush1.bf16.msra.mxu0 0
    %319 = vmatprep.subr.bf16.mxu0 0
    %320 = vmatpush1.bf16.msra.mxu0 0
    %321 = vmatprep.subr.bf16.mxu0 0
    %322 = vmatpush1.bf16.msra.mxu0 0
    %323 = vmatprep.subr.bf16.mxu0 0
    %324 = vmatpush1.bf16.msra.mxu0 0
    %325 = vmatprep.subr.bf16.mxu0 0
    %326 = vmatpush1.bf16.msra.mxu0 0
    %327 = vmatprep.subr.bf16.mxu0 0
    %328 = vmatpush1.bf16.msra.mxu0 0
    %329 = vmatprep.mubr.bf16.mxu0 0
    %330 = vmatmul.mubr.bf16.gmra.mrb[0].mxu0 %v295
    %v331 = vpop.f32.mrb[0].mxu0
    %v332 = vadd.f32 %v93, %v331
    %v333 = vpop.f32.mrb[0].mxu0
    %v334 = vpop.f32.mrb[0].mxu0
    %v335 = vpop.f32.mrb[0].mxu0
    %336 = vdwg.mxu0
    %v337 = vmax.f32 %v332, 0.0
    %v338 = vmax.f32 %v246, %v337
    %339 = vrot.lane.b32.xlu0 %v154, 80
    %v340 = vpop.permute.xlu0 %339
    %v342 = vsel %vm43, %v340, 0
    %344 = vmatprep.subr.bf16.mxu0 0
    %345 = vmatpush1.bf16.msra.mxu0 %v41
    %346 = vmatprep.subr.bf16.mxu0 0
    %347 = vmatpush1.bf16.msra.mxu0 0
    %348 = vmatprep.subr.bf16.mxu0 0
    %349 = vmatpush1.bf16.msra.mxu0 0
    %350 = vmatprep.subr.bf16.mxu0 0
    %351 = vmatpush1.bf16.msra.mxu0 0
    %352 = vmatprep.subr.bf16.mxu0 0
    %353 = vmatpush1.bf16.msra.mxu0 0
    %354 = vmatprep.subr.bf16.mxu0 0
    %355 = vmatpush1.bf16.msra.mxu0 0
    %356 = vmatprep.subr.bf16.mxu0 0
    %357 = vmatpush1.bf16.msra.mxu0 0
    %358 = vmatprep.subr.bf16.mxu0 0
    %359 = vmatpush1.bf16.msra.mxu0 0
    %360 = vmatprep.subr.bf16.mxu0 0
    %361 = vmatpush1.bf16.msra.mxu0 0
    %362 = vmatprep.subr.bf16.mxu0 0
    %363 = vmatpush1.bf16.msra.mxu0 0
    %364 = vmatprep.subr.bf16.mxu0 0
    %365 = vmatpush1.bf16.msra.mxu0 0
    %366 = vmatprep.subr.bf16.mxu0 0
    %367 = vmatpush1.bf16.msra.mxu0 0
    %368 = vmatprep.subr.bf16.mxu0 0
    %369 = vmatpush1.bf16.msra.mxu0 0
    %370 = vmatprep.subr.bf16.mxu0 0
    %371 = vmatpush1.bf16.msra.mxu0 0
    %372 = vmatprep.subr.bf16.mxu0 0
    %373 = vmatpush1.bf16.msra.mxu0 0
    %374 = vmatprep.subr.bf16.mxu0 0
    %375 = vmatpush1.bf16.msra.mxu0 0
    %376 = vmatprep.mubr.bf16.mxu0 0
    %377 = vmatmul.mubr.bf16.gmra.mrb[0].mxu0 %v342
    %v378 = vpop.f32.mrb[0].mxu0
    %v379 = vadd.f32 %v35, %v378
    %v380 = vpop.f32.mrb[0].mxu0
    %v381 = vpop.f32.mrb[0].mxu0
    %v382 = vpop.f32.mrb[0].mxu0
    %383 = vdwg.mxu0
    %v384 = vmax.f32 %v379, 0.0
    %v385 = vpack.c.bf16 %v384, %v384
    %v387 = vsel %vm107, %v385, 0
    %389 = vmatprep.subr.bf16.mxu0 0
    %390 = vmatpush1.bf16.msra.mxu0 %v103
    %391 = vmatprep.subr.bf16.mxu0 0
    %392 = vmatpush1.bf16.msra.mxu0 %v104
    %393 = vmatprep.subr.bf16.mxu0 0
    %394 = vmatpush1.bf16.msra.mxu0 0
    %395 = vmatprep.subr.bf16.mxu0 0
    %396 = vmatpush1.bf16.msra.mxu0 0
    %397 = vmatprep.subr.bf16.mxu0 0
    %398 = vmatpush1.bf16.msra.mxu0 0
    %399 = vmatprep.subr.bf16.mxu0 0
    %400 = vmatpush1.bf16.msra.mxu0 0
    %401 = vmatprep.subr.bf16.mxu0 0
    %402 = vmatpush1.bf16.msra.mxu0 0
    %403 = vmatprep.subr.bf16.mxu0 0
    %404 = vmatpush1.bf16.msra.mxu0 0
    %405 = vmatprep.subr.bf16.mxu0 0
    %406 = vmatpush1.bf16.msra.mxu0 0
    %407 = vmatprep.subr.bf16.mxu0 0
    %408 = vmatpush1.bf16.msra.mxu0 0
    %409 = vmatprep.subr.bf16.mxu0 0
    %410 = vmatpush1.bf16.msra.mxu0 0
    %411 = vmatprep.subr.bf16.mxu0 0
    %412 = vmatpush1.bf16.msra.mxu0 0
    %413 = vmatprep.subr.bf16.mxu0 0
    %414 = vmatpush1.bf16.msra.mxu0 0
    %415 = vmatprep.subr.bf16.mxu0 0
    %416 = vmatpush1.bf16.msra.mxu0 0
    %417 = vmatprep.subr.bf16.mxu0 0
    %418 = vmatpush1.bf16.msra.mxu0 0
    %419 = vmatprep.subr.bf16.mxu0 0
    %420 = vmatpush1.bf16.msra.mxu0 0
    %421 = vmatprep.mubr.bf16.mxu0 0
    %422 = vmatmul.mubr.bf16.gmra.mrb[0].mxu0 %v387
    %v423 = vpop.f32.mrb[0].mxu0
    %v424 = vadd.f32 %v93, %v423
    %v425 = vpop.f32.mrb[0].mxu0
    %v426 = vpop.f32.mrb[0].mxu0
    %v427 = vpop.f32.mrb[0].mxu0
    %428 = vdwg.mxu0
    %v429 = vmax.f32 %v424, 0.0
    %v430 = vmax.f32 %v338, %v429
    %431 = vrot.lane.b32.xlu0 %v154, 64
    %v432 = vpop.permute.xlu0 %431
    %v434 = vsel %vm43, %v432, 0
    %436 = vmatprep.subr.bf16.mxu0 0
    %437 = vmatpush1.bf16.msra.mxu0 %v41
    %438 = vmatprep.subr.bf16.mxu0 0
    %439 = vmatpush1.bf16.msra.mxu0 0
    %440 = vmatprep.subr.bf16.mxu0 0
    %441 = vmatpush1.bf16.msra.mxu0 0
    %442 = vmatprep.subr.bf16.mxu0 0
    %443 = vmatpush1.bf16.msra.mxu0 0
    %444 = vmatprep.subr.bf16.mxu0 0
    %445 = vmatpush1.bf16.msra.mxu0 0
    %446 = vmatprep.subr.bf16.mxu0 0
    %447 = vmatpush1.bf16.msra.mxu0 0
    %448 = vmatprep.subr.bf16.mxu0 0
    %449 = vmatpush1.bf16.msra.mxu0 0
    %450 = vmatprep.subr.bf16.mxu0 0
    %451 = vmatpush1.bf16.msra.mxu0 0
    %452 = vmatprep.subr.bf16.mxu0 0
    %453 = vmatpush1.bf16.msra.mxu0 0
    %454 = vmatprep.subr.bf16.mxu0 0
    %455 = vmatpush1.bf16.msra.mxu0 0
    %456 = vmatprep.subr.bf16.mxu0 0
    %457 = vmatpush1.bf16.msra.mxu0 0
    %458 = vmatprep.subr.bf16.mxu0 0
    %459 = vmatpush1.bf16.msra.mxu0 0
    %460 = vmatprep.subr.bf16.mxu0 0
    %461 = vmatpush1.bf16.msra.mxu0 0
    %462 = vmatprep.subr.bf16.mxu0 0
    %463 = vmatpush1.bf16.msra.mxu0 0
    %464 = vmatprep.subr.bf16.mxu0 0
    %465 = vmatpush1.bf16.msra.mxu0 0
    %466 = vmatprep.subr.bf16.mxu0 0
    %467 = vmatpush1.bf16.msra.mxu0 0
    %468 = vmatprep.mubr.bf16.mxu0 0
    %469 = vmatmul.mubr.bf16.gmra.mrb[0].mxu0 %v434
    %v470 = vpop.f32.mrb[0].mxu0
    %v471 = vadd.f32 %v35, %v470
    %v472 = vpop.f32.mrb[0].mxu0
    %v473 = vpop.f32.mrb[0].mxu0
    %v474 = vpop.f32.mrb[0].mxu0
    %475 = vdwg.mxu0
    %v476 = vmax.f32 %v471, 0.0
    %v477 = vpack.c.bf16 %v476, %v476
    %v479 = vsel %vm107, %v477, 0
    %481 = vmatprep.subr.bf16.mxu0 0
    %482 = vmatpush1.bf16.msra.mxu0 %v103
    %483 = vmatprep.subr.bf16.mxu0 0
    %484 = vmatpush1.bf16.msra.mxu0 %v104
    %485 = vmatprep.subr.bf16.mxu0 0
    %486 = vmatpush1.bf16.msra.mxu0 0
    %487 = vmatprep.subr.bf16.mxu0 0
    %488 = vmatpush1.bf16.msra.mxu0 0
    %489 = vmatprep.subr.bf16.mxu0 0
    %490 = vmatpush1.bf16.msra.mxu0 0
    %491 = vmatprep.subr.bf16.mxu0 0
    %492 = vmatpush1.bf16.msra.mxu0 0
    %493 = vmatprep.subr.bf16.mxu0 0
    %494 = vmatpush1.bf16.msra.mxu0 0
    %495 = vmatprep.subr.bf16.mxu0 0
    %496 = vmatpush1.bf16.msra.mxu0 0
    %497 = vmatprep.subr.bf16.mxu0 0
    %498 = vmatpush1.bf16.msra.mxu0 0
    %499 = vmatprep.subr.bf16.mxu0 0
    %500 = vmatpush1.bf16.msra.mxu0 0
    %501 = vmatprep.subr.bf16.mxu0 0
    %502 = vmatpush1.bf16.msra.mxu0 0
    %503 = vmatprep.subr.bf16.mxu0 0
    %504 = vmatpush1.bf16.msra.mxu0 0
    %505 = vmatprep.subr.bf16.mxu0 0
    %506 = vmatpush1.bf16.msra.mxu0 0
    %507 = vmatprep.subr.bf16.mxu0 0
    %508 = vmatpush1.bf16.msra.mxu0 0
    %509 = vmatprep.subr.bf16.mxu0 0
    %510 = vmatpush1.bf16.msra.mxu0 0
    %511 = vmatprep.subr.bf16.mxu0 0
    %512 = vmatpush1.bf16.msra.mxu0 0
    %513 = vmatprep.mubr.bf16.mxu0 0
    %514 = vmatmul.mubr.bf16.gmra.mrb[0].mxu0 %v479
    %v515 = vpop.f32.mrb[0].mxu0
    %v516 = vadd.f32 %v93, %v515
    %v517 = vpop.f32.mrb[0].mxu0
    %v518 = vpop.f32.mrb[0].mxu0
    %v519 = vpop.f32.mrb[0].mxu0
    %520 = vdwg.mxu0
    %v521 = vmax.f32 %v516, 0.0
    %v522 = vmax.f32 %v430, %v521
    %523 = vrot.lane.b32.xlu0 %v154, 48
    %v524 = vpop.permute.xlu0 %523
    %v526 = vsel %vm43, %v524, 0
    %528 = vmatprep.subr.bf16.mxu0 0
    %529 = vmatpush1.bf16.msra.mxu0 %v41
    %530 = vmatprep.subr.bf16.mxu0 0
    %531 = vmatpush1.bf16.msra.mxu0 0
    %532 = vmatprep.subr.bf16.mxu0 0
    %533 = vmatpush1.bf16.msra.mxu0 0
    %534 = vmatprep.subr.bf16.mxu0 0
    %535 = vmatpush1.bf16.msra.mxu0 0
    %536 = vmatprep.subr.bf16.mxu0 0
    %537 = vmatpush1.bf16.msra.mxu0 0
    %538 = vmatprep.subr.bf16.mxu0 0
    %539 = vmatpush1.bf16.msra.mxu0 0
    %540 = vmatprep.subr.bf16.mxu0 0
    %541 = vmatpush1.bf16.msra.mxu0 0
    %542 = vmatprep.subr.bf16.mxu0 0
    %543 = vmatpush1.bf16.msra.mxu0 0
    %544 = vmatprep.subr.bf16.mxu0 0
    %545 = vmatpush1.bf16.msra.mxu0 0
    %546 = vmatprep.subr.bf16.mxu0 0
    %547 = vmatpush1.bf16.msra.mxu0 0
    %548 = vmatprep.subr.bf16.mxu0 0
    %549 = vmatpush1.bf16.msra.mxu0 0
    %550 = vmatprep.subr.bf16.mxu0 0
    %551 = vmatpush1.bf16.msra.mxu0 0
    %552 = vmatprep.subr.bf16.mxu0 0
    %553 = vmatpush1.bf16.msra.mxu0 0
    %554 = vmatprep.subr.bf16.mxu0 0
    %555 = vmatpush1.bf16.msra.mxu0 0
    %556 = vmatprep.subr.bf16.mxu0 0
    %557 = vmatpush1.bf16.msra.mxu0 0
    %558 = vmatprep.subr.bf16.mxu0 0
    %559 = vmatpush1.bf16.msra.mxu0 0
    %560 = vmatprep.mubr.bf16.mxu0 0
    %561 = vmatmul.mubr.bf16.gmra.mrb[0].mxu0 %v526
    %v562 = vpop.f32.mrb[0].mxu0
    %v563 = vadd.f32 %v35, %v562
    %v564 = vpop.f32.mrb[0].mxu0
    %v565 = vpop.f32.mrb[0].mxu0
    %v566 = vpop.f32.mrb[0].mxu0
    %567 = vdwg.mxu0
    %v568 = vmax.f32 %v563, 0.0
    %v569 = vpack.c.bf16 %v568, %v568
    %v571 = vsel %vm107, %v569, 0
    %573 = vmatprep.subr.bf16.mxu0 0
    %574 = vmatpush1.bf16.msra.mxu0 %v103
    %575 = vmatprep.subr.bf16.mxu0 0
    %576 = vmatpush1.bf16.msra.mxu0 %v104
    %577 = vmatprep.subr.bf16.mxu0 0
    %578 = vmatpush1.bf16.msra.mxu0 0
    %579 = vmatprep.subr.bf16.mxu0 0
    %580 = vmatpush1.bf16.msra.mxu0 0
    %581 = vmatprep.subr.bf16.mxu0 0
    %582 = vmatpush1.bf16.msra.mxu0 0
    %583 = vmatprep.subr.bf16.mxu0 0
    %584 = vmatpush1.bf16.msra.mxu0 0
    %585 = vmatprep.subr.bf16.mxu0 0
    %586 = vmatpush1.bf16.msra.mxu0 0
    %587 = vmatprep.subr.bf16.mxu0 0
    %588 = vmatpush1.bf16.msra.mxu0 0
    %589 = vmatprep.subr.bf16.mxu0 0
    %590 = vmatpush1.bf16.msra.mxu0 0
    %591 = vmatprep.subr.bf16.mxu0 0
    %592 = vmatpush1.bf16.msra.mxu0 0
    %593 = vmatprep.subr.bf16.mxu0 0
    %594 = vmatpush1.bf16.msra.mxu0 0
    %595 = vmatprep.subr.bf16.mxu0 0
    %596 = vmatpush1.bf16.msra.mxu0 0
    %597 = vmatprep.subr.bf16.mxu0 0
    %598 = vmatpush1.bf16.msra.mxu0 0
    %599 = vmatprep.subr.bf16.mxu0 0
    %600 = vmatpush1.bf16.msra.mxu0 0
    %601 = vmatprep.subr.bf16.mxu0 0
    %602 = vmatpush1.bf16.msra.mxu0 0
    %603 = vmatprep.subr.bf16.mxu0 0
    %604 = vmatpush1.bf16.msra.mxu0 0
    %605 = vmatprep.mubr.bf16.mxu0 0
    %606 = vmatmul.mubr.bf16.gmra.mrb[0].mxu0 %v571
    %v607 = vpop.f32.mrb[0].mxu0
    %v608 = vadd.f32 %v93, %v607
    %v609 = vpop.f32.mrb[0].mxu0
    %v610 = vpop.f32.mrb[0].mxu0
    %v611 = vpop.f32.mrb[0].mxu0
    %612 = vdwg.mxu0
    %v613 = vmax.f32 %v608, 0.0
    %v614 = vmax.f32 %v522, %v613
    %615 = vrot.lane.b32.xlu0 %v154, 32
    %v616 = vpop.permute.xlu0 %615
    %v618 = vsel %vm43, %v616, 0
    %620 = vmatprep.subr.bf16.mxu0 0
    %621 = vmatpush1.bf16.msra.mxu0 %v41
    %622 = vmatprep.subr.bf16.mxu0 0
    %623 = vmatpush1.bf16.msra.mxu0 0
    %624 = vmatprep.subr.bf16.mxu0 0
    %625 = vmatpush1.bf16.msra.mxu0 0
    %626 = vmatprep.subr.bf16.mxu0 0
    %627 = vmatpush1.bf16.msra.mxu0 0
    %628 = vmatprep.subr.bf16.mxu0 0
    %629 = vmatpush1.bf16.msra.mxu0 0
    %630 = vmatprep.subr.bf16.mxu0 0
    %631 = vmatpush1.bf16.msra.mxu0 0
    %632 = vmatprep.subr.bf16.mxu0 0
    %633 = vmatpush1.bf16.msra.mxu0 0
    %634 = vmatprep.subr.bf16.mxu0 0
    %635 = vmatpush1.bf16.msra.mxu0 0
    %636 = vmatprep.subr.bf16.mxu0 0
    %637 = vmatpush1.bf16.msra.mxu0 0
    %638 = vmatprep.subr.bf16.mxu0 0
    %639 = vmatpush1.bf16.msra.mxu0 0
    %640 = vmatprep.subr.bf16.mxu0 0
    %641 = vmatpush1.bf16.msra.mxu0 0
    %642 = vmatprep.subr.bf16.mxu0 0
    %643 = vmatpush1.bf16.msra.mxu0 0
    %644 = vmatprep.subr.bf16.mxu0 0
    %645 = vmatpush1.bf16.msra.mxu0 0
    %646 = vmatprep.subr.bf16.mxu0 0
    %647 = vmatpush1.bf16.msra.mxu0 0
    %648 = vmatprep.subr.bf16.mxu0 0
    %649 = vmatpush1.bf16.msra.mxu0 0
    %650 = vmatprep.subr.bf16.mxu0 0
    %651 = vmatpush1.bf16.msra.mxu0 0
    %652 = vmatprep.mubr.bf16.mxu0 0
    %653 = vmatmul.mubr.bf16.gmra.mrb[0].mxu0 %v618
    %v654 = vpop.f32.mrb[0].mxu0
    %v655 = vadd.f32 %v35, %v654
    %v656 = vpop.f32.mrb[0].mxu0
    %v657 = vpop.f32.mrb[0].mxu0
    %v658 = vpop.f32.mrb[0].mxu0
    %659 = vdwg.mxu0
    %v660 = vmax.f32 %v655, 0.0
    %v661 = vpack.c.bf16 %v660, %v660
    %v663 = vsel %vm107, %v661, 0
    %665 = vmatprep.subr.bf16.mxu0 0
    %666 = vmatpush1.bf16.msra.mxu0 %v103
    %667 = vmatprep.subr.bf16.mxu0 0
    %668 = vmatpush1.bf16.msra.mxu0 %v104
    %669 = vmatprep.subr.bf16.mxu0 0
    %670 = vmatpush1.bf16.msra.mxu0 0
    %671 = vmatprep.subr.bf16.mxu0 0
    %672 = vmatpush1.bf16.msra.mxu0 0
    %673 = vmatprep.subr.bf16.mxu0 0
    %674 = vmatpush1.bf16.msra.mxu0 0
    %675 = vmatprep.subr.bf16.mxu0 0
    %676 = vmatpush1.bf16.msra.mxu0 0
    %677 = vmatprep.subr.bf16.mxu0 0
    %678 = vmatpush1.bf16.msra.mxu0 0
    %679 = vmatprep.subr.bf16.mxu0 0
    %680 = vmatpush1.bf16.msra.mxu0 0
    %681 = vmatprep.subr.bf16.mxu0 0
    %682 = vmatpush1.bf16.msra.mxu0 0
    %683 = vmatprep.subr.bf16.mxu0 0
    %684 = vmatpush1.bf16.msra.mxu0 0
    %685 = vmatprep.subr.bf16.mxu0 0
    %686 = vmatpush1.bf16.msra.mxu0 0
    %687 = vmatprep.subr.bf16.mxu0 0
    %688 = vmatpush1.bf16.msra.mxu0 0
    %689 = vmatprep.subr.bf16.mxu0 0
    %690 = vmatpush1.bf16.msra.mxu0 0
    %691 = vmatprep.subr.bf16.mxu0 0
    %692 = vmatpush1.bf16.msra.mxu0 0
    %693 = vmatprep.subr.bf16.mxu0 0
    %694 = vmatpush1.bf16.msra.mxu0 0
    %695 = vmatprep.subr.bf16.mxu0 0
    %696 = vmatpush1.bf16.msra.mxu0 0
    %697 = vmatprep.mubr.bf16.mxu0 0
    %698 = vmatmul.mubr.bf16.gmra.mrb[0].mxu0 %v663
    %v699 = vpop.f32.mrb[0].mxu0
    %v700 = vadd.f32 %v93, %v699
    %v701 = vpop.f32.mrb[0].mxu0
    %v702 = vpop.f32.mrb[0].mxu0
    %v703 = vpop.f32.mrb[0].mxu0
    %704 = vdwg.mxu0
    %v705 = vmax.f32 %v700, 0.0
    %v706 = vmax.f32 %v614, %v705
    %707 = vrot.lane.b32.xlu0 %v154, 16
    %v708 = vpop.permute.xlu0 %707
    %v710 = vsel %vm43, %v708, 0
    %712 = vmatprep.subr.bf16.mxu0 0
    %713 = vmatpush1.bf16.msra.mxu0 %v41
    %714 = vmatprep.subr.bf16.mxu0 0
    %715 = vmatpush1.bf16.msra.mxu0 0
    %716 = vmatprep.subr.bf16.mxu0 0
    %717 = vmatpush1.bf16.msra.mxu0 0
    %718 = vmatprep.subr.bf16.mxu0 0
    %719 = vmatpush1.bf16.msra.mxu0 0
    %720 = vmatprep.subr.bf16.mxu0 0
    %721 = vmatpush1.bf16.msra.mxu0 0
    %722 = vmatprep.subr.bf16.mxu0 0
    %723 = vmatpush1.bf16.msra.mxu0 0
    %724 = vmatprep.subr.bf16.mxu0 0
    %725 = vmatpush1.bf16.msra.mxu0 0
    %726 = vmatprep.subr.bf16.mxu0 0
    %727 = vmatpush1.bf16.msra.mxu0 0
    %728 = vmatprep.subr.bf16.mxu0 0
    %729 = vmatpush1.bf16.msra.mxu0 0
    %730 = vmatprep.subr.bf16.mxu0 0
    %731 = vmatpush1.bf16.msra.mxu0 0
    %732 = vmatprep.subr.bf16.mxu0 0
    %733 = vmatpush1.bf16.msra.mxu0 0
    %734 = vmatprep.subr.bf16.mxu0 0
    %735 = vmatpush1.bf16.msra.mxu0 0
    %736 = vmatprep.subr.bf16.mxu0 0
    %737 = vmatpush1.bf16.msra.mxu0 0
    %738 = vmatprep.subr.bf16.mxu0 0
    %739 = vmatpush1.bf16.msra.mxu0 0
    %740 = vmatprep.subr.bf16.mxu0 0
    %741 = vmatpush1.bf16.msra.mxu0 0
    %742 = vmatprep.subr.bf16.mxu0 0
    %743 = vmatpush1.bf16.msra.mxu0 0
    %744 = vmatprep.mubr.bf16.mxu0 0
    %745 = vmatmul.mubr.bf16.gmra.mrb[0].mxu0 %v710
    %v746 = vpop.f32.mrb[0].mxu0
    %v747 = vadd.f32 %v35, %v746
    %v748 = vpop.f32.mrb[0].mxu0
    %v749 = vpop.f32.mrb[0].mxu0
    %v750 = vpop.f32.mrb[0].mxu0
    %751 = vdwg.mxu0
    %v752 = vmax.f32 %v747, 0.0
    %v753 = vpack.c.bf16 %v752, %v752
    %v755 = vsel %vm107, %v753, 0
    %757 = vmatprep.subr.bf16.mxu0 0
    %758 = vmatpush1.bf16.msra.mxu0 %v103
    %759 = vmatprep.subr.bf16.mxu0 0
    %760 = vmatpush1.bf16.msra.mxu0 %v104
    %761 = vmatprep.subr.bf16.mxu0 0
    %762 = vmatpush1.bf16.msra.mxu0 0
    %763 = vmatprep.subr.bf16.mxu0 0
    %764 = vmatpush1.bf16.msra.mxu0 0
    %765 = vmatprep.subr.bf16.mxu0 0
    %766 = vmatpush1.bf16.msra.mxu0 0
    %767 = vmatprep.subr.bf16.mxu0 0
    %768 = vmatpush1.bf16.msra.mxu0 0
    %769 = vmatprep.subr.bf16.mxu0 0
    %770 = vmatpush1.bf16.msra.mxu0 0
    %771 = vmatprep.subr.bf16.mxu0 0
    %772 = vmatpush1.bf16.msra.mxu0 0
    %773 = vmatprep.subr.bf16.mxu0 0
    %774 = vmatpush1.bf16.msra.mxu0 0
    %775 = vmatprep.subr.bf16.mxu0 0
    %776 = vmatpush1.bf16.msra.mxu0 0
    %777 = vmatprep.subr.bf16.mxu0 0
    %778 = vmatpush1.bf16.msra.mxu0 0
    %779 = vmatprep.subr.bf16.mxu0 0
    %780 = vmatpush1.bf16.msra.mxu0 0
    %781 = vmatprep.subr.bf16.mxu0 0
    %782 = vmatpush1.bf16.msra.mxu0 0
    %783 = vmatprep.subr.bf16.mxu0 0
    %784 = vmatpush1.bf16.msra.mxu0 0
    %785 = vmatprep.subr.bf16.mxu0 0
    %786 = vmatpush1.bf16.msra.mxu0 0
    %787 = vmatprep.subr.bf16.mxu0 0
    %788 = vmatpush1.bf16.msra.mxu0 0
    %789 = vmatprep.mubr.bf16.mxu0 0
    %790 = vmatmul.mubr.bf16.gmra.mrb[0].mxu0 %v755
    %v791 = vpop.f32.mrb[0].mxu0
    %v792 = vadd.f32 %v93, %v791
    %v793 = vpop.f32.mrb[0].mxu0
    %v794 = vpop.f32.mrb[0].mxu0
    %v795 = vpop.f32.mrb[0].mxu0
    %796 = vdwg.mxu0
    %v797 = vmax.f32 %v792, 0.0
    %v798 = vmax.f32 %v706, %v797
    %799 = vst.msk [vmem:[#allocation2] sm:$0xff] %vm107, %v798
    // Predicated region
    $region22: #{transition_down.1} parent=1 // pred_check
      _
    $region23: #{transition_down.1} parent=1 // pred_check_branch
      %801 = sbr.rel (0) target = $region25
    $region24: #{transition_down.1} parent=1 // pred_region
      %s803 = ssub.s32 128, 128
      %804 = vsyncadd [#allocation3], %s803
      %s806 = sshll.u32 [#allocation2], 4
      %s807 = int_to_ptr.vmem [resolvable:$true] %s806
      %809 = dma.vmem_to_hbm [thread:$0]  %s807, 128, %s5, [#allocation3]
    $region25: #{transition_down.1} parent=1 // pred_fallthru
      _
    // Predicated region
    $region26: #{transition_down.1} parent=1 // pred_check
      _
    $region27: #{transition_down.1} parent=1 // pred_check_branch
      %811 = sbr.rel (0) target = $region29
    $region28: #{transition_down.1} parent=1 // pred_region
      %812 = dma.done [#allocation3], 128
    $region29: #{transition_down.1} parent=1 // pred_fallthru
      _
    %813 = vsyncpa [#allocation3], 1

</llo_original>
